<compile_context>
chip_gen: v6e
topology: v6e:2x2x1
jax: 0.10.0
libtpu: 0.0.40
codegen_flags: <defaults>
</compile_context>

<pallas_src>
import functools

import jax
import jax.numpy as jnp
from jax.experimental import pallas as pl
from jax.experimental.pallas import tpu as pltpu


def _round_up(x, m):
    return -(-x // m) * m


def _softplus(x):
    # Numerically-stable softplus: max(x,0) + log1p(exp(-|x|))  (VPU + EUP ops)
    return jnp.maximum(x, 0.0) + jnp.log1p(jnp.exp(-jnp.abs(x)))


def planar_kernel(z_ref, h_ref, w_ref, b_ref, out_ref, *, flow_depth, zd_pad):
    """Batch on the lane axis: z (zd_pad, TB), h (h_dim, TB), out (zd_pad+1, TB)."""
    K = flow_depth
    z = z_ref[...]                                    # (zd_pad, TB) f32
    h = h_ref[...]                                    # (h_dim, TB) f32/bf16
    wt = w_ref[...]                                   # (n_out, h_dim) f32/bf16
    bias = b_ref[...]                                 # (n_out, 1)  f32

    # One fused amortization matmul on the MXU: (n_out, h_dim) @ (h_dim, TB).
    proj = jnp.dot(wt, h, preferred_element_type=jnp.float32) + bias   # (n_out, TB) f32

    tb = z.shape[1]
    u_all = proj[0:K * zd_pad, :].reshape(K, zd_pad, tb)               # h_to_u(h)
    w_all = proj[K * zd_pad:2 * K * zd_pad, :].reshape(K, zd_pad, tb)  # h_to_w(h)
    b_all = proj[2 * K * zd_pad:2 * K * zd_pad + K, :]                 # h_to_b(h), (K, TB)

    # ---- z-independent per-k math, batched across all k (single EUP/VALU passes) ----
    uw = jnp.sum(w_all * u_all, axis=1)                                # (K, TB)
    m_uw = -1.0 + _softplus(uw)                                        # one softplus
    w_norm_sq = jnp.sum(w_all * w_all, axis=1)                         # (K, TB)
    # Exact divide (not approx reciprocal): preserves the w.u_hat >= -1 invertibility
    # construction; clamp keeps padded batch lanes finite (they are discarded anyway).
    scale = (m_uw - uw) / jnp.maximum(w_norm_sq, 1e-30)                # (K, TB)
    u_hat = u_all + scale[:, None, :] * w_all                          # (K, zd_pad, TB)
    wu_hat = jnp.sum(w_all * u_hat, axis=1)                            # (K, TB)

    # ---- serial flow steps: only the z-dependent chain remains per k ----
    det_prod = jnp.ones((1, tb), jnp.float32)
    for k in range(K):                                 # small, static K -> unrolled
        w_k = w_all[k]                                                 # (zd_pad, TB)
        wzb = jnp.sum(w_k * z, axis=0, keepdims=True) + b_all[k:k + 1, :]   # (1, TB)
        t = jnp.tanh(wzb)
        z = z + u_hat[k] * t
        # psi.u_hat = (1 - t^2) * (w . u_hat); accumulate the determinant product,
        # take a single log after the loop (fine for small K / moderate psi_u).
        det_prod = det_prod * (1.0 + (1.0 - t * t) * wu_hat[k:k + 1, :])

    logdet = jnp.log(jnp.abs(det_prod))                                # one log call

    # One combined lane-dense output slab: rows [0:zd_pad] = z_k, row zd_pad = logdet.
    out_ref[0:zd_pad, :] = z
    out_ref[zd_pad:zd_pad + 1, :] = logdet


def _fuse_weight(params, K, z_dim, zd_pad, h_dim):
    """Concatenate the three Linear weights (pre-transposed, per-k blocks padded to zd_pad rows)."""
    def pad_blocks(w):                       # w: (h_dim, K*z_dim) -> (K*zd_pad, h_dim)
        wt = w.T.reshape(K, z_dim, h_dim)
        wt = jnp.pad(wt, ((0, 0), (0, zd_pad - z_dim), (0, 0)))
        return wt.reshape(K * zd_pad, h_dim)

    def pad_bias(b):                         # b: (1, K*z_dim) -> (K*zd_pad,)
        bt = b.reshape(K, z_dim)
        bt = jnp.pad(bt, ((0, 0), (0, zd_pad - z_dim)))
        return bt.reshape(K * zd_pad)

    w_fused = jnp.concatenate(
        [pad_blocks(params["wu"]), pad_blocks(params["ww"]), params["wb"].T], axis=0)
    b_fused = jnp.concatenate(
        [pad_bias(params["bu"]), pad_bias(params["bw"]), params["bb"].reshape(K)], axis=0)
    return w_fused, b_fused.reshape(-1, 1)


def planar_forward(z, h, params, *, flow_depth, z_dim,
                   batch_tile=4096, matmul_dtype=jnp.bfloat16):
    """z: (B, z_dim) f32, h: (B, h_dim).  Returns (z_k (B, z_dim), logdet (B,)).

    Note: with the default matmul_dtype=bfloat16, h and the fused amortization
    weight are bf16-rounded before the projection (f32 accumulation, f32 flow
    math).  Pass matmul_dtype=jnp.float32 for tight parity with the f32 reference.
    """
    B = z.shape[0]
    h_dim = h.shape[1]
    K = flow_depth
    zd_pad = _round_up(z_dim, 8)             # sublane-aligned per-k block height
    n_out = 2 * K * zd_pad + K

    w_fused, b_fused = _fuse_weight(params, K, z_dim, zd_pad, h_dim)
    w_t = w_fused.astype(matmul_dtype)        # (n_out, h_dim), resident across grid
    b_t = b_fused.astype(jnp.float32)         # (n_out, 1)

    # Batch tiling (batch rides the lane axis):
    #  * small B  -> one lane-padded tile (multiple of 128, keeps stores lane-dense)
    #  * larger B -> tiles of up to `batch_tile`, capped near B/2 so the grid has
    #    >= 2 steps and both v7x TensorCores get work.
    if B < 256:
        tb = _round_up(B, 128)
    else:
        tb = min(_round_up(batch_tile, 128), _round_up(-(-B // 2), 128))
    b_pad = _round_up(B, tb)

    # Layout flip to (feature, batch).  Left un-materialized where possible: jit the
    # caller so XLA fuses pad+transpose+cast into one copy per array; callers that
    # already hold z/h feature-major can bypass these transposes entirely.
    z_t = jnp.pad(z.astype(jnp.float32),
                  ((0, b_pad - B), (0, zd_pad - z_dim))).T              # (zd_pad, b_pad)
    h_t = jnp.pad(h, ((0, b_pad - B), (0, 0))).T.astype(matmul_dtype)   # (h_dim, b_pad)

    kern = functools.partial(planar_kernel, flow_depth=K, zd_pad=zd_pad)
    out = pl.pallas_call(
        kern,
        out_shape=jax.ShapeDtypeStruct((zd_pad + 1, b_pad), jnp.float32),
        grid_spec=pltpu.PrefetchScalarGridSpec(
            num_scalar_prefetch=0,
            grid=(b_pad // tb,),
            in_specs=[
                pl.BlockSpec((zd_pad, tb), lambda i: (0, i)),       # z tile
                pl.BlockSpec((h_dim, tb), lambda i: (0, i)),        # h tile
                pl.BlockSpec((n_out, h_dim), lambda i: (0, 0)),     # fused weight (resident)
                pl.BlockSpec((n_out, 1), lambda i: (0, 0)),         # fused bias   (resident)
            ],
            out_specs=pl.BlockSpec((zd_pad + 1, tb), lambda i: (0, i)),
        ),
        compiler_params=pltpu.CompilerParams(
            dimension_semantics=("parallel",),       # shard batch tiles over TCs (v7x)
            vmem_limit_bytes=32 * 1024 * 1024,       # ample even at tb=8192; v7x-safe
        ),
    )(z_t, h_t, w_t, b_t)

    z_out = out[:z_dim, :B].T             # (B, z_dim)
    logdet = out[zd_pad, :B]              # (B,)
    return z_out, logdet


def planar_reference(z, h, params, *, flow_depth, z_dim):
    """Pure-JAX reference mirroring the PyTorch module, for verification."""
    u_all = h @ params["wu"] + params["bu"]
    w_all = h @ params["ww"] + params["bw"]
    b_all = h @ params["wb"] + params["bb"]
    logdet = jnp.zeros((z.shape[0],), jnp.float32)
    for k in range(flow_depth):
        u_k = u_all[:, k * z_dim:(k + 1) * z_dim]
        w_k = w_all[:, k * z_dim:(k + 1) * z_dim]
        b_k = b_all[:, k:k + 1]
        uw = jnp.sum(w_k * u_k, axis=1, keepdims=True)
        m_uw = -1.0 + jax.nn.softplus(uw)
        u_hat = u_k + (m_uw - uw) * w_k / jnp.sum(w_k ** 2, axis=1, keepdims=True)
        wzb = jnp.sum(w_k * z, axis=1, keepdims=True) + b_k
        t = jnp.tanh(wzb)
        z = z + u_hat * t
        psi_u = jnp.sum(w_k * (1.0 - t * t) * u_hat, axis=1, keepdims=True)
        logdet = logdet + jnp.log(jnp.abs(1.0 + psi_u))[:, 0]
    return z, logdet


def _make_params(key, h_dim, z_dim, flow_depth, scale=0.1):
    k1, k2, k3, k4, k5, k6 = jax.random.split(key, 6)
    # nn.Linear weights stored pre-transposed as (in_features, out_features);
    # biases as (1, out_features) for broadcasting.
    return {
        "wu": scale * jax.random.normal(k1, (h_dim, flow_depth * z_dim), jnp.float32),
        "bu": scale * jax.random.normal(k2, (1, flow_depth * z_dim), jnp.float32),
        "ww": scale * jax.random.normal(k3, (h_dim, flow_depth * z_dim), jnp.float32),
        "bw": scale * jax.random.normal(k4, (1, flow_depth * z_dim), jnp.float32),
        "wb": scale * jax.random.normal(k5, (h_dim, flow_depth), jnp.float32),
        "bb": scale * jax.random.normal(k6, (1, flow_depth), jnp.float32),
    }


if __name__ == "__main__":
    H_DIM, Z_DIM, FLOW_DEPTH = 32, 8, 4

    key = jax.random.PRNGKey(0)
    kp, kz, kh, kz2, kh2 = jax.random.split(key, 5)
    params = _make_params(kp, H_DIM, Z_DIM, FLOW_DEPTH)

    # jit the whole forward so XLA fuses the wrapper-side pad/transpose/cast.
    fwd_bf16 = jax.jit(functools.partial(
        planar_forward, flow_depth=FLOW_DEPTH, z_dim=Z_DIM))
    fwd_f32 = jax.jit(functools.partial(
        planar_forward, flow_depth=FLOW_DEPTH, z_dim=Z_DIM, matmul_dtype=jnp.float32))

    # --- test 1: small batch (B=2), single lane-padded tile, f32 + bf16 paths ---
    B = 2
    z = jax.random.normal(kz, (B, Z_DIM), jnp.float32)
    h = jax.random.normal(kh, (B, H_DIM), jnp.float32)
    z_ref, ld_ref = planar_reference(z, h, params, flow_depth=FLOW_DEPTH, z_dim=Z_DIM)

    z_k32, ld32 = fwd_f32(z, h, params)
    jax.block_until_ready((z_k32, ld32))
    assert z_k32.shape == (B, Z_DIM) and ld32.shape == (B,)
    assert jnp.allclose(z_k32, z_ref, atol=1e-4, rtol=1e-4)
    assert jnp.allclose(ld32, ld_ref, atol=1e-4, rtol=1e-4)

    z_k16, ld16 = fwd_bf16(z, h, params)
    jax.block_until_ready((z_k16, ld16))
    # Wider tolerance: bf16-rounded h/weights feed the amortization matmul.
    assert jnp.allclose(z_k16, z_ref, atol=3e-2, rtol=3e-2)
    assert jnp.allclose(ld16, ld_ref, atol=3e-2, rtol=3e-2)

    # --- test 2: medium batch (B=384) -> 2 batch tiles of 256 (exercises the
    #     multi-tile / megacore path and lane padding of the last tile) ---
    B2 = 384
    z2 = jax.random.normal(kz2, (B2, Z_DIM), jnp.float32)
    h2 = jax.random.normal(kh2, (B2, H_DIM), jnp.float32)
    z2_k, ld2 = fwd_bf16(z2, h2, params)
    jax.block_until_ready((z2_k, ld2))
    z2_ref, ld2_ref = planar_reference(z2, h2, params, flow_depth=FLOW_DEPTH, z_dim=Z_DIM)
    assert z2_k.shape == (B2, Z_DIM) and ld2.shape == (B2,)
    assert jnp.allclose(z2_k, z2_ref, atol=3e-2, rtol=3e-2)
    assert jnp.allclose(ld2, ld2_ref, atol=3e-2, rtol=3e-2)

    print("KERNEL_OK")
</pallas_src>

<mosaic_0001>
module attributes {stable_mosaic.version = 11 : i64} {
  func.func @planar_kernel(%arg0: i32, %arg1: memref<8x128xf32, #tpu.memory_space<vmem>>, %arg2: memref<32x128xf32, #tpu.memory_space<vmem>>, %arg3: memref<68x32xf32, #tpu.memory_space<vmem>>, %arg4: memref<68x1xf32, #tpu.memory_space<vmem>>, %arg5: memref<9x128xf32, #tpu.memory_space<vmem>>) attributes {dimension_semantics = [#tpu.dimension_semantics<parallel>], iteration_bounds = array<i64: 1>, scalar_prefetch = 0 : i64, scratch_operands = 0 : i64, tpu.core_type = #tpu.core_type<tc>, window_params = [{transform_indices = @transform_0, window_bounds = array<i64: 8, 128>}, {transform_indices = @transform_1, window_bounds = array<i64: 32, 128>}, {pipeline_mode = #tpu.pipeline_mode<synchronous>, transform_indices = @transform_2, window_bounds = array<i64: 68, 32>}, {pipeline_mode = #tpu.pipeline_mode<synchronous>, transform_indices = @transform_3, window_bounds = array<i64: 68, 1>}, {transform_indices = @transform_4, window_bounds = array<i64: 9, 128>}]} {
    %c0 = arith.constant 0 : index
    %c0_0 = arith.constant 0 : index
    %0 = vector.load %arg1[%c0, %c0_0] : memref<8x128xf32, #tpu.memory_space<vmem>>, vector<8x128xf32>
    %c0_1 = arith.constant 0 : index
    %c0_2 = arith.constant 0 : index
    %1 = vector.load %arg2[%c0_1, %c0_2] : memref<32x128xf32, #tpu.memory_space<vmem>>, vector<32x128xf32>
    %c0_3 = arith.constant 0 : index
    %c0_4 = arith.constant 0 : index
    %2 = vector.load %arg3[%c0_3, %c0_4] : memref<68x32xf32, #tpu.memory_space<vmem>>, vector<68x32xf32>
    %c0_5 = arith.constant 0 : index
    %c0_6 = arith.constant 0 : index
    %3 = vector.load %arg4[%c0_5, %c0_6] : memref<68x1xf32, #tpu.memory_space<vmem>>, vector<68x1xf32>
    %cst = arith.constant dense<0.000000e+00> : vector<68x128xf32>
    %4 = tpu.matmul %2, %1, %cst {dimension_numbers = #tpu.dot_dimension_numbers<[1], [0], [0], [1], [0, 0, 1, 1], [], []>} : vector<68x32xf32>, vector<32x128xf32>, vector<68x128xf32> -> vector<68x128xf32>
    %5 = vector.broadcast %3 : vector<68x1xf32> to vector<68x128xf32>
    %6 = arith.addf %4, %5 : vector<68x128xf32>
    %7 = vector.extract_strided_slice %6 {offsets = [0, 0], sizes = [32, 128], strides = [1, 1]} : vector<68x128xf32> to vector<32x128xf32>
    %8 = vector.shape_cast %7 : vector<32x128xf32> to vector<4x8x128xf32>
    %9 = vector.extract_strided_slice %6 {offsets = [32, 0], sizes = [32, 128], strides = [1, 1]} : vector<68x128xf32> to vector<32x128xf32>
    %10 = vector.shape_cast %9 : vector<32x128xf32> to vector<4x8x128xf32>
    %11 = vector.extract_strided_slice %6 {offsets = [64, 0], sizes = [4, 128], strides = [1, 1]} : vector<68x128xf32> to vector<4x128xf32>
    %12 = arith.mulf %10, %8 : vector<4x8x128xf32>
    %cst_7 = arith.constant dense<0.000000e+00> : vector<4x128xf32>
    %13 = vector.multi_reduction <add>, %12, %cst_7 [1] : vector<4x8x128xf32> to vector<4x128xf32>
    %cst_8 = arith.constant 0.000000e+00 : f32
    %14 = vector.broadcast %cst_8 : f32 to vector<4x128xf32>
    %15 = arith.maximumf %13, %14 : vector<4x128xf32>
    %16 = math.absf %13 : vector<4x128xf32>
    %cst_9 = arith.constant 0.000000e+00 : f32
    %17 = vector.broadcast %cst_9 : f32 to vector<4x128xf32>
    %18 = arith.subf %17, %16 : vector<4x128xf32>
    %19 = math.exp %18 : vector<4x128xf32>
    %20 = math.log1p %19 : vector<4x128xf32>
    %21 = arith.addf %15, %20 : vector<4x128xf32>
    %cst_10 = arith.constant -1.000000e+00 : f32
    %22 = vector.broadcast %cst_10 : f32 to vector<4x128xf32>
    %23 = arith.addf %22, %21 : vector<4x128xf32>
    %24 = arith.mulf %10, %10 : vector<4x8x128xf32>
    %cst_11 = arith.constant dense<0.000000e+00> : vector<4x128xf32>
    %25 = vector.multi_reduction <add>, %24, %cst_11 [1] : vector<4x8x128xf32> to vector<4x128xf32>
    %26 = arith.subf %23, %13 : vector<4x128xf32>
    %cst_12 = arith.constant 1.000000e-30 : f32
    %27 = vector.broadcast %cst_12 : f32 to vector<4x128xf32>
    %28 = arith.maximumf %25, %27 : vector<4x128xf32>
    %29 = arith.divf %26, %28 : vector<4x128xf32>
    %30 = vector.shape_cast %29 : vector<4x128xf32> to vector<4x1x128xf32>
    %31 = vector.broadcast %30 : vector<4x1x128xf32> to vector<4x8x128xf32>
    %32 = arith.mulf %31, %10 : vector<4x8x128xf32>
    %33 = arith.addf %8, %32 : vector<4x8x128xf32>
    %34 = arith.mulf %10, %33 : vector<4x8x128xf32>
    %cst_13 = arith.constant dense<0.000000e+00> : vector<4x128xf32>
    %35 = vector.multi_reduction <add>, %34, %cst_13 [1] : vector<4x8x128xf32> to vector<4x128xf32>
    %cst_14 = arith.constant 1.000000e+00 : f32
    %36 = vector.broadcast %cst_14 : f32 to vector<1x128xf32>
    %37 = vector.extract_strided_slice %10 {offsets = [0, 0, 0], sizes = [1, 8, 128], strides = [1, 1, 1]} : vector<4x8x128xf32> to vector<1x8x128xf32>
    %38 = vector.shape_cast %37 : vector<1x8x128xf32> to vector<8x128xf32>
    %39 = arith.mulf %38, %0 : vector<8x128xf32>
    %cst_15 = arith.constant dense<0.000000e+00> : vector<128xf32>
    %40 = vector.multi_reduction <add>, %39, %cst_15 [0] : vector<8x128xf32> to vector<128xf32>
    %41 = vector.shape_cast %40 : vector<128xf32> to vector<1x128xf32>
    %42 = vector.extract_strided_slice %11 {offsets = [0, 0], sizes = [1, 128], strides = [1, 1]} : vector<4x128xf32> to vector<1x128xf32>
    %43 = arith.addf %41, %42 : vector<1x128xf32>
    %44 = math.tanh %43 : vector<1x128xf32>
    %45 = vector.extract_strided_slice %33 {offsets = [0, 0, 0], sizes = [1, 8, 128], strides = [1, 1, 1]} : vector<4x8x128xf32> to vector<1x8x128xf32>
    %46 = vector.shape_cast %45 : vector<1x8x128xf32> to vector<8x128xf32>
    %47 = vector.broadcast %44 : vector<1x128xf32> to vector<8x128xf32>
    %48 = arith.mulf %46, %47 : vector<8x128xf32>
    %49 = arith.addf %0, %48 : vector<8x128xf32>
    %50 = arith.mulf %44, %44 : vector<1x128xf32>
    %cst_16 = arith.constant 1.000000e+00 : f32
    %51 = vector.broadcast %cst_16 : f32 to vector<1x128xf32>
    %52 = arith.subf %51, %50 : vector<1x128xf32>
    %53 = vector.extract_strided_slice %35 {offsets = [0, 0], sizes = [1, 128], strides = [1, 1]} : vector<4x128xf32> to vector<1x128xf32>
    %54 = arith.mulf %52, %53 : vector<1x128xf32>
    %cst_17 = arith.constant 1.000000e+00 : f32
    %55 = vector.broadcast %cst_17 : f32 to vector<1x128xf32>
    %56 = arith.addf %55, %54 : vector<1x128xf32>
    %57 = arith.mulf %36, %56 : vector<1x128xf32>
    %58 = vector.extract_strided_slice %10 {offsets = [1, 0, 0], sizes = [1, 8, 128], strides = [1, 1, 1]} : vector<4x8x128xf32> to vector<1x8x128xf32>
    %59 = vector.shape_cast %58 : vector<1x8x128xf32> to vector<8x128xf32>
    %60 = arith.mulf %59, %49 : vector<8x128xf32>
    %cst_18 = arith.constant dense<0.000000e+00> : vector<128xf32>
    %61 = vector.multi_reduction <add>, %60, %cst_18 [0] : vector<8x128xf32> to vector<128xf32>
    %62 = vector.shape_cast %61 : vector<128xf32> to vector<1x128xf32>
    %63 = vector.extract_strided_slice %11 {offsets = [1, 0], sizes = [1, 128], strides = [1, 1]} : vector<4x128xf32> to vector<1x128xf32>
    %64 = arith.addf %62, %63 : vector<1x128xf32>
    %65 = math.tanh %64 : vector<1x128xf32>
    %66 = vector.extract_strided_slice %33 {offsets = [1, 0, 0], sizes = [1, 8, 128], strides = [1, 1, 1]} : vector<4x8x128xf32> to vector<1x8x128xf32>
    %67 = vector.shape_cast %66 : vector<1x8x128xf32> to vector<8x128xf32>
    %68 = vector.broadcast %65 : vector<1x128xf32> to vector<8x128xf32>
    %69 = arith.mulf %67, %68 : vector<8x128xf32>
    %70 = arith.addf %49, %69 : vector<8x128xf32>
    %71 = arith.mulf %65, %65 : vector<1x128xf32>
    %cst_19 = arith.constant 1.000000e+00 : f32
    %72 = vector.broadcast %cst_19 : f32 to vector<1x128xf32>
    %73 = arith.subf %72, %71 : vector<1x128xf32>
    %74 = vector.extract_strided_slice %35 {offsets = [1, 0], sizes = [1, 128], strides = [1, 1]} : vector<4x128xf32> to vector<1x128xf32>
    %75 = arith.mulf %73, %74 : vector<1x128xf32>
    %cst_20 = arith.constant 1.000000e+00 : f32
    %76 = vector.broadcast %cst_20 : f32 to vector<1x128xf32>
    %77 = arith.addf %76, %75 : vector<1x128xf32>
    %78 = arith.mulf %57, %77 : vector<1x128xf32>
    %79 = vector.extract_strided_slice %10 {offsets = [2, 0, 0], sizes = [1, 8, 128], strides = [1, 1, 1]} : vector<4x8x128xf32> to vector<1x8x128xf32>
    %80 = vector.shape_cast %79 : vector<1x8x128xf32> to vector<8x128xf32>
    %81 = arith.mulf %80, %70 : vector<8x128xf32>
    %cst_21 = arith.constant dense<0.000000e+00> : vector<128xf32>
    %82 = vector.multi_reduction <add>, %81, %cst_21 [0] : vector<8x128xf32> to vector<128xf32>
    %83 = vector.shape_cast %82 : vector<128xf32> to vector<1x128xf32>
    %84 = vector.extract_strided_slice %11 {offsets = [2, 0], sizes = [1, 128], strides = [1, 1]} : vector<4x128xf32> to vector<1x128xf32>
    %85 = arith.addf %83, %84 : vector<1x128xf32>
    %86 = math.tanh %85 : vector<1x128xf32>
    %87 = vector.extract_strided_slice %33 {offsets = [2, 0, 0], sizes = [1, 8, 128], strides = [1, 1, 1]} : vector<4x8x128xf32> to vector<1x8x128xf32>
    %88 = vector.shape_cast %87 : vector<1x8x128xf32> to vector<8x128xf32>
    %89 = vector.broadcast %86 : vector<1x128xf32> to vector<8x128xf32>
    %90 = arith.mulf %88, %89 : vector<8x128xf32>
    %91 = arith.addf %70, %90 : vector<8x128xf32>
    %92 = arith.mulf %86, %86 : vector<1x128xf32>
    %cst_22 = arith.constant 1.000000e+00 : f32
    %93 = vector.broadcast %cst_22 : f32 to vector<1x128xf32>
    %94 = arith.subf %93, %92 : vector<1x128xf32>
    %95 = vector.extract_strided_slice %35 {offsets = [2, 0], sizes = [1, 128], strides = [1, 1]} : vector<4x128xf32> to vector<1x128xf32>
    %96 = arith.mulf %94, %95 : vector<1x128xf32>
    %cst_23 = arith.constant 1.000000e+00 : f32
    %97 = vector.broadcast %cst_23 : f32 to vector<1x128xf32>
    %98 = arith.addf %97, %96 : vector<1x128xf32>
    %99 = arith.mulf %78, %98 : vector<1x128xf32>
    %100 = vector.extract_strided_slice %10 {offsets = [3, 0, 0], sizes = [1, 8, 128], strides = [1, 1, 1]} : vector<4x8x128xf32> to vector<1x8x128xf32>
    %101 = vector.shape_cast %100 : vector<1x8x128xf32> to vector<8x128xf32>
    %102 = arith.mulf %101, %91 : vector<8x128xf32>
    %cst_24 = arith.constant dense<0.000000e+00> : vector<128xf32>
    %103 = vector.multi_reduction <add>, %102, %cst_24 [0] : vector<8x128xf32> to vector<128xf32>
    %104 = vector.shape_cast %103 : vector<128xf32> to vector<1x128xf32>
    %105 = vector.extract_strided_slice %11 {offsets = [3, 0], sizes = [1, 128], strides = [1, 1]} : vector<4x128xf32> to vector<1x128xf32>
    %106 = arith.addf %104, %105 : vector<1x128xf32>
    %107 = math.tanh %106 : vector<1x128xf32>
    %108 = vector.extract_strided_slice %33 {offsets = [3, 0, 0], sizes = [1, 8, 128], strides = [1, 1, 1]} : vector<4x8x128xf32> to vector<1x8x128xf32>
    %109 = vector.shape_cast %108 : vector<1x8x128xf32> to vector<8x128xf32>
    %110 = vector.broadcast %107 : vector<1x128xf32> to vector<8x128xf32>
    %111 = arith.mulf %109, %110 : vector<8x128xf32>
    %112 = arith.addf %91, %111 : vector<8x128xf32>
    %113 = arith.mulf %107, %107 : vector<1x128xf32>
    %cst_25 = arith.constant 1.000000e+00 : f32
    %114 = vector.broadcast %cst_25 : f32 to vector<1x128xf32>
    %115 = arith.subf %114, %113 : vector<1x128xf32>
    %116 = vector.extract_strided_slice %35 {offsets = [3, 0], sizes = [1, 128], strides = [1, 1]} : vector<4x128xf32> to vector<1x128xf32>
    %117 = arith.mulf %115, %116 : vector<1x128xf32>
    %cst_26 = arith.constant 1.000000e+00 : f32
    %118 = vector.broadcast %cst_26 : f32 to vector<1x128xf32>
    %119 = arith.addf %118, %117 : vector<1x128xf32>
    %120 = arith.mulf %99, %119 : vector<1x128xf32>
    %121 = math.absf %120 : vector<1x128xf32>
    %122 = math.log %121 : vector<1x128xf32>
    %c0_27 = arith.constant 0 : index
    %c0_28 = arith.constant 0 : index
    %123 = vector.load %arg5[%c0_27, %c0_28] : memref<9x128xf32, #tpu.memory_space<vmem>>, vector<8x128xf32>
    tpu.vector_store %arg5[%c0_27, %c0_28], %112 {strides = array<i32>} : memref<9x128xf32, #tpu.memory_space<vmem>>, vector<8x128xf32>,
    %c8 = arith.constant 8 : index
    %c0_29 = arith.constant 0 : index
    %124 = vector.load %arg5[%c8, %c0_29] : memref<9x128xf32, #tpu.memory_space<vmem>>, vector<1x128xf32>
    tpu.vector_store %arg5[%c8, %c0_29], %122 {strides = array<i32>} : memref<9x128xf32, #tpu.memory_space<vmem>>, vector<1x128xf32>,
    return
  }
  func.func @transform_0(%arg0: i32) -> (i32, i32) {
    %c0_i32 = arith.constant 0 : i32
    %c0_i32_0 = arith.constant 0 : i32
    return %c0_i32, %arg0 : i32, i32
  }
  func.func @transform_1(%arg0: i32) -> (i32, i32) {
    %c0_i32 = arith.constant 0 : i32
    %c0_i32_0 = arith.constant 0 : i32
    return %c0_i32, %arg0 : i32, i32
  }
  func.func @transform_2(%arg0: i32) -> (i32, i32) {
    %c0_i32 = arith.constant 0 : i32
    %c0_i32_0 = arith.constant 0 : i32
    %c0_i32_1 = arith.constant 0 : i32
    return %c0_i32, %c0_i32_0 : i32, i32
  }
  func.func @transform_3(%arg0: i32) -> (i32, i32) {
    %c0_i32 = arith.constant 0 : i32
    %c0_i32_0 = arith.constant 0 : i32
    %c0_i32_1 = arith.constant 0 : i32
    return %c0_i32, %c0_i32_0 : i32, i32
  }
  func.func @transform_4(%arg0: i32) -> (i32, i32) {
    %c0_i32 = arith.constant 0 : i32
    %c0_i32_0 = arith.constant 0 : i32
    return %c0_i32, %arg0 : i32, i32
  }
}

</mosaic_0001>

<llo_original>
// kernel: planar_forward.1
$region0: #{planar_forward.1}
  #allocation0 [shape = 'u32[]', space=smem, size = 0x4, offset = 0x4, fixed_abs, tag = 'smem constant byte address 0x4 - core index']
  #allocation1 [shape = 'u32[144,128]{1,0:T(1,128)}', space=vmem, size = 0x12000, scoped, tag = 'internal scratch']
  %s0 = inlined_call_operand.vmem [shape: f32[8,128], index: 0, kind: input, shape index: {}]
  %s1 = inlined_call_operand.vmem [shape: f32[32,128], index: 1, kind: input, shape index: {}]
  %s2 = inlined_call_operand.vmem [shape: f32[68,32], index: 2, kind: input, shape index: {}]
  %s3 = inlined_call_operand.vmem [shape: f32[68,1], index: 3, kind: input, shape index: {}]
  %s4 = inlined_call_operand.vmem [shape: f32[9,128], index: 4, kind: output, shape index: {}]
  %s5 = sld [smem:[#allocation0]]
  $region26: #{planar_forward.1} parent=0
    _
  %s7 = ssub.s32 1, %s5
  %s8 = scalar_select 0, %s7, %s5
  // Predicated region
  $region2: #{planar_forward.1} parent=0 // pred_check
    _
  $region3: #{planar_forward.1} parent=0 // pred_check_branch
    %10 = sbr.rel (0) target = $region5
  $region4: #{planar_forward.1} parent=0 // pred_region
    _
  $region5: #{planar_forward.1} parent=0 // pred_fallthru
    _
  // Predicated region
  $region6: #{planar_forward.1} parent=0 // pred_check
    _
  $region7: #{planar_forward.1} parent=0 // pred_check_branch
    %12 = sbr.rel (0) target = $region9
  $region8: #{planar_forward.1} parent=0 // pred_region
    _
  $region9: #{planar_forward.1} parent=0 // pred_fallthru
    _
  // Predicated region
  $region10: #{planar_forward.1} parent=0 // pred_check
    _
  $region11: #{planar_forward.1} parent=0 // pred_check_branch
    %14 = sbr.rel (0) target = $region13
  $region12: #{planar_forward.1} parent=0 // pred_region
    _
  $region13: #{planar_forward.1} parent=0 // pred_fallthru
    _
  // Predicated region
  $region14: #{planar_forward.1} parent=0 // pred_check
    _
  $region15: #{planar_forward.1} parent=0 // pred_check_branch
    %16 = sbr.rel (0) target = $region17
  $region16: #{planar_forward.1} parent=0 // pred_region
    _
  $region17: #{planar_forward.1} parent=0 // pred_fallthru
    _
  %v17 = vld [vmem:[%s0] sm:$0xff]
  %v18 = vld [vmem:[%s1] sm:$0xff]
  %v19 = vld [vmem:[%s1 + $0x8] sm:$0xff]
  %v20 = vld [vmem:[%s1 + $0x10] sm:$0xff]
  %v21 = vld [vmem:[%s1 + $0x18] sm:$0xff]
  %v22 = vld [vmem:[%s2] sm:$0xff]
  %v23 = vld [vmem:[%s2 + $0x8] sm:$0xff]
  %v24 = vld [vmem:[%s2 + $0x10] sm:$0xff]
  %v25 = vld [vmem:[%s2 + $0x18] sm:$0xff]
  %v26 = vld [vmem:[%s2 + $0x20] sm:$0xff]
  %v27 = vld [vmem:[%s2 + $0x28] sm:$0xff]
  %v28 = vld [vmem:[%s2 + $0x30] sm:$0xff]
  %v29 = vld [vmem:[%s2 + $0x38] sm:$0xff]
  %v30 = vld [vmem:[%s2 + $0x40] sm:$0xf]
  %v31 = vld [vmem:[%s3] sm:$0xff]
  %v32 = vld [vmem:[%s3 + $0x8] sm:$0xff]
  %v33 = vld [vmem:[%s3 + $0x10] sm:$0xff]
  %v34 = vld [vmem:[%s3 + $0x18] sm:$0xff]
  %v35 = vld [vmem:[%s3 + $0x20] sm:$0xff]
  %v36 = vld [vmem:[%s3 + $0x28] sm:$0xff]
  %v37 = vld [vmem:[%s3 + $0x30] sm:$0xff]
  %v38 = vld [vmem:[%s3 + $0x38] sm:$0xff]
  %v39 = vld [vmem:[%s3 + $0x40] sm:$0xf]
  %41 = vset.pattern.permute.xlu0 0
  %42 = vperm.xlu0 %41, %v31
  %v43 = vpop.permute.xlu0 %42
  %46 = vset.pattern.permute.xlu0 0
  %47 = vperm.xlu0 %46, %v32
  %v48 = vpop.permute.xlu0 %47
  %51 = vset.pattern.permute.xlu0 0
  %52 = vperm.xlu0 %51, %v33
  %v53 = vpop.permute.xlu0 %52
  %56 = vset.pattern.permute.xlu0 0
  %57 = vperm.xlu0 %56, %v34
  %v58 = vpop.permute.xlu0 %57
  %61 = vset.pattern.permute.xlu0 0
  %62 = vperm.xlu0 %61, %v35
  %v63 = vpop.permute.xlu0 %62
  %66 = vset.pattern.permute.xlu0 0
  %67 = vperm.xlu0 %66, %v36
  %v68 = vpop.permute.xlu0 %67
  %71 = vset.pattern.permute.xlu0 0
  %72 = vperm.xlu0 %71, %v37
  %v73 = vpop.permute.xlu0 %72
  %76 = vset.pattern.permute.xlu0 0
  %77 = vperm.xlu0 %76, %v38
  %v78 = vpop.permute.xlu0 %77
  %81 = vset.pattern.permute.xlu0 0
  %82 = vperm.xlu0 %81, %v39
  %v83 = vpop.permute.xlu0 %82
  %vm85 = vcmask 261120
  %v87 = vsel %vm85, %v22, 0
  %v90 = vsel %vm85, %v23, 0
  %v93 = vsel %vm85, %v24, 0
  %v96 = vsel %vm85, %v25, 0
  %v99 = vsel %vm85, %v26, 0
  %v102 = vsel %vm85, %v27, 0
  %v105 = vsel %vm85, %v28, 0
  %v108 = vsel %vm85, %v29, 0
  %v111 = vsel %vm85, %v30, 0
  %113 = vmatprep.subr.mxu0 0.0
  %114 = vmatpush1.msra.mxu0 0.0
  %115 = vmatprep.subr.mxu0 0.0
  %116 = vmatpush1.msra.mxu0 0.0
  %117 = vmatprep.subr.mxu0 0.0
  %118 = vmatpush1.msra.mxu0 0.0
  %119 = vmatprep.subr.mxu0 0.0
  %120 = vmatpush1.msra.mxu0 0.0
  %121 = vmatprep.subr.mxu0 0.0
  %122 = vmatpush1.msra.mxu0 0.0
  %123 = vmatprep.subr.mxu0 0.0
  %124 = vmatpush1.msra.mxu0 0.0
  %125 = vmatprep.subr.mxu0 0.0
  %126 = vmatpush1.msra.mxu0 0.0
  %127 = vmatprep.subr.mxu0 0.0
  %128 = vmatpush1.msra.mxu0 0.0
  %129 = vmatprep.subr.mxu0 0.0
  %130 = vmatpush1.msra.mxu0 0.0
  %131 = vmatprep.subr.mxu0 0.0
  %132 = vmatpush1.msra.mxu0 0.0
  %133 = vmatprep.subr.mxu0 0.0
  %134 = vmatpush1.msra.mxu0 0.0
  %135 = vmatprep.subr.mxu0 0.0
  %136 = vmatpush1.msra.mxu0 0.0
  %137 = vmatprep.subr.mxu0 0.0
  %138 = vmatpush1.msra.mxu0 %v21
  %139 = vmatprep.subr.mxu0 0.0
  %140 = vmatpush1.msra.mxu0 %v20
  %141 = vmatprep.subr.mxu0 0.0
  %142 = vmatpush1.msra.mxu0 %v19
  %143 = vmatprep.subr.mxu0 0.0
  %144 = vmatpush1.msra.mxu0 %v18
  %145 = vmatprep.subr.mxu0 0.0
  %146 = vmatpush2.msra.mxu0 0.0
  %147 = vmatprep.subr.mxu0 0.0
  %148 = vmatpush2.msra.mxu0 0.0
  %149 = vmatprep.subr.mxu0 0.0
  %150 = vmatpush2.msra.mxu0 0.0
  %151 = vmatprep.subr.mxu0 0.0
  %152 = vmatpush2.msra.mxu0 0.0
  %153 = vmatprep.subr.mxu0 0.0
  %154 = vmatpush2.msra.mxu0 0.0
  %155 = vmatprep.subr.mxu0 0.0
  %156 = vmatpush2.msra.mxu0 0.0
  %157 = vmatprep.subr.mxu0 0.0
  %158 = vmatpush2.msra.mxu0 0.0
  %159 = vmatprep.subr.mxu0 0.0
  %160 = vmatpush2.msra.mxu0 0.0
  %161 = vmatprep.subr.mxu0 0.0
  %162 = vmatpush2.msra.mxu0 0.0
  %163 = vmatprep.subr.mxu0 0.0
  %164 = vmatpush2.msra.mxu0 0.0
  %165 = vmatprep.subr.mxu0 0.0
  %166 = vmatpush2.msra.mxu0 0.0
  %167 = vmatprep.subr.mxu0 0.0
  %168 = vmatpush2.msra.mxu0 0.0
  %169 = vmatprep.subr.mxu0 0.0
  %170 = vmatpush2.msra.mxu0 0.0
  %171 = vmatprep.subr.mxu0 0.0
  %172 = vmatpush2.msra.mxu0 0.0
  %173 = vmatprep.subr.mxu0 0.0
  %174 = vmatpush2.msra.mxu0 0.0
  %175 = vmatprep.subr.mxu0 0.0
  %176 = vmatpush2.msra.mxu0 0.0
  %177 = vmatprep.mubr.f32.mxu0 0.0
  %178 = vmatmul.mubr.f32.gmra.mxu0 %v87
  %v179 = vpop.f32.mrf.mxu0
  %v180 = vadd.f32 %v43, %v179
  %v181 = vpop.f32.mrf.mxu0
  %182 = vmatprep.mubr.f32.mxu0 0.0
  %183 = vmatmul.mubr.f32.gmra.mxu0 %v90
  %v184 = vpop.f32.mrf.mxu0
  %v185 = vadd.f32 %v48, %v184
  %v186 = vpop.f32.mrf.mxu0
  %187 = vmatprep.mubr.f32.mxu0 0.0
  %188 = vmatmul.mubr.f32.gmra.mxu0 %v93
  %v189 = vpop.f32.mrf.mxu0
  %v190 = vadd.f32 %v53, %v189
  %v191 = vpop.f32.mrf.mxu0
  %192 = vmatprep.mubr.f32.mxu0 0.0
  %193 = vmatmul.mubr.f32.gmra.mxu0 %v96
  %v194 = vpop.f32.mrf.mxu0
  %v195 = vadd.f32 %v58, %v194
  %v196 = vpop.f32.mrf.mxu0
  %197 = vmatprep.mubr.f32.mxu0 0.0
  %198 = vmatmul.mubr.f32.gmra.mxu0 %v99
  %v199 = vpop.f32.mrf.mxu0
  %v200 = vadd.f32 %v63, %v199
  %v201 = vpop.f32.mrf.mxu0
  %202 = vmatprep.mubr.f32.mxu0 0.0
  %203 = vmatmul.mubr.f32.gmra.mxu0 %v102
  %v204 = vpop.f32.mrf.mxu0
  %v205 = vadd.f32 %v68, %v204
  %v206 = vpop.f32.mrf.mxu0
  %207 = vmatprep.mubr.f32.mxu0 0.0
  %208 = vmatmul.mubr.f32.gmra.mxu0 %v105
  %v209 = vpop.f32.mrf.mxu0
  %v210 = vadd.f32 %v73, %v209
  %v211 = vpop.f32.mrf.mxu0
  %212 = vmatprep.mubr.f32.mxu0 0.0
  %213 = vmatmul.mubr.f32.gmra.mxu0 %v108
  %v214 = vpop.f32.mrf.mxu0
  %v215 = vadd.f32 %v78, %v214
  %v216 = vpop.f32.mrf.mxu0
  %217 = vmatprep.mubr.f32.mxu0 0.0
  %218 = vmatmul.mubr.f32.gmra.mxu0 %v111
  %v219 = vpop.f32.mrf.mxu0
  %v220 = vadd.f32 %v83, %v219
  %v221 = vpop.f32.mrf.mxu0
  %222 = vdwg.mxu0
  %v223 = vmul.f32 %v200, %v180
  %v224 = vmul.f32 %v205, %v185
  %v225 = vmul.f32 %v210, %v190
  %v226 = vmul.f32 %v215, %v195
  %v227 = vrot.slane %v223, 4
  %v228 = vadd.f32 %v223, %v227
  %v229 = vrot.slane %v228, 2
  %v230 = vadd.f32 %v228, %v229
  %v231 = vrot.slane %v230, 1
  %v232 = vadd.f32 %v230, %v231
  %v233 = vrot.slane %v224, 4
  %v234 = vadd.f32 %v224, %v233
  %v235 = vrot.slane %v234, 2
  %v236 = vadd.f32 %v234, %v235
  %v237 = vrot.slane %v236, 1
  %v238 = vadd.f32 %v236, %v237
  %v239 = vrot.slane %v225, 4
  %v240 = vadd.f32 %v225, %v239
  %v241 = vrot.slane %v240, 2
  %v242 = vadd.f32 %v240, %v241
  %v243 = vrot.slane %v242, 1
  %v244 = vadd.f32 %v242, %v243
  %v245 = vrot.slane %v226, 4
  %v246 = vadd.f32 %v226, %v245
  %v247 = vrot.slane %v246, 2
  %v248 = vadd.f32 %v246, %v247
  %v249 = vrot.slane %v248, 1
  %v250 = vadd.f32 %v248, %v249
  %v251 = vmax.f32 %v232, 0.0
  %v252 = vmax.f32 %v238, 0.0
  %v253 = vmax.f32 %v244, 0.0
  %v254 = vmax.f32 %v250, 0.0
  %v255 = vand.u32 2147483647, %v232
  %v256 = vand.u32 2147483647, %v238
  %v257 = vand.u32 2147483647, %v244
  %v258 = vand.u32 2147483647, %v250
  %v259 = vsub.f32 0.0, %v255
  %v260 = vsub.f32 0.0, %v256
  %v261 = vsub.f32 0.0, %v257
  %v262 = vsub.f32 0.0, %v258
  %v263 = vmul.f32 %v259, 1.442695
  %v264 = vpow.pop %v263
  %v265 = vmul.f32 %v260, 1.442695
  %v266 = vpow.pop %v265
  %v267 = vmul.f32 %v261, 1.442695
  %v268 = vpow.pop %v267
  %v269 = vmul.f32 %v262, 1.442695
  %v270 = vpow.pop %v269
  %v271 = vadd.f32 %v264, 1.0
  %v272 = vlog2.pop %v271
  %v273 = vmul.f32 %v272, 0.6931472
  %v274 = vmul.f32 -0.5, %v264
  %v275 = vadd.f32 %v274, 1.0
  %v276 = vmul.f32 %v275, %v264
  %v277 = vand.u32 2147483647, %v264
  %vm278 = vcmp.lt.f32.partialorder %v277, 0.0004427343
  %v279 = vsel %vm278, %v276, %v273
  %v280 = vadd.f32 %v266, 1.0
  %v281 = vlog2.pop %v280
  %v282 = vmul.f32 %v281, 0.6931472
  %v283 = vmul.f32 -0.5, %v266
  %v284 = vadd.f32 %v283, 1.0
  %v285 = vmul.f32 %v284, %v266
  %v286 = vand.u32 2147483647, %v266
  %vm287 = vcmp.lt.f32.partialorder %v286, 0.0004427343
  %v288 = vsel %vm287, %v285, %v282
  %v289 = vadd.f32 %v268, 1.0
  %v290 = vlog2.pop %v289
  %v291 = vmul.f32 %v290, 0.6931472
  %v292 = vmul.f32 -0.5, %v268
  %v293 = vadd.f32 %v292, 1.0
  %v294 = vmul.f32 %v293, %v268
  %v295 = vand.u32 2147483647, %v268
  %vm296 = vcmp.lt.f32.partialorder %v295, 0.0004427343
  %v297 = vsel %vm296, %v294, %v291
  %v298 = vadd.f32 %v270, 1.0
  %v299 = vlog2.pop %v298
  %v300 = vmul.f32 %v299, 0.6931472
  %v301 = vmul.f32 -0.5, %v270
  %v302 = vadd.f32 %v301, 1.0
  %v303 = vmul.f32 %v302, %v270
  %v304 = vand.u32 2147483647, %v270
  %vm305 = vcmp.lt.f32.partialorder %v304, 0.0004427343
  %v306 = vsel %vm305, %v303, %v300
  %v307 = vadd.f32 %v251, %v279
  %v308 = vadd.f32 %v252, %v288
  %v309 = vadd.f32 %v253, %v297
  %v310 = vadd.f32 %v254, %v306
  %v311 = vadd.f32 %v307, -1.0
  %v312 = vadd.f32 %v308, -1.0
  %v313 = vadd.f32 %v309, -1.0
  %v314 = vadd.f32 %v310, -1.0
  %v315 = vmul.f32 %v200, %v200
  %v316 = vmul.f32 %v205, %v205
  %v317 = vmul.f32 %v210, %v210
  %v318 = vmul.f32 %v215, %v215
  %v319 = vrot.slane %v315, 4
  %v320 = vadd.f32 %v315, %v319
  %v321 = vrot.slane %v320, 2
  %v322 = vadd.f32 %v320, %v321
  %v323 = vrot.slane %v322, 1
  %v324 = vadd.f32 %v322, %v323
  %v325 = vrot.slane %v316, 4
  %v326 = vadd.f32 %v316, %v325
  %v327 = vrot.slane %v326, 2
  %v328 = vadd.f32 %v326, %v327
  %v329 = vrot.slane %v328, 1
  %v330 = vadd.f32 %v328, %v329
  %v331 = vrot.slane %v317, 4
  %v332 = vadd.f32 %v317, %v331
  %v333 = vrot.slane %v332, 2
  %v334 = vadd.f32 %v332, %v333
  %v335 = vrot.slane %v334, 1
  %v336 = vadd.f32 %v334, %v335
  %v337 = vrot.slane %v318, 4
  %v338 = vadd.f32 %v318, %v337
  %v339 = vrot.slane %v338, 2
  %v340 = vadd.f32 %v338, %v339
  %v341 = vrot.slane %v340, 1
  %v342 = vadd.f32 %v340, %v341
  %v343 = vsub.f32 %v311, %v232
  %v344 = vsub.f32 %v312, %v238
  %v345 = vsub.f32 %v313, %v244
  %v346 = vsub.f32 %v314, %v250
  %v347 = vmax.f32 %v324, 1e-30
  %v348 = vmax.f32 %v330, 1e-30
  %v349 = vmax.f32 %v336, 1e-30
  %v350 = vmax.f32 %v342, 1e-30
  %v351 = vrcp.pop %v347
  %v352 = vmul.f32 %v343, %v351
  %v353 = vrcp.pop %v348
  %v354 = vmul.f32 %v344, %v353
  %v355 = vrcp.pop %v349
  %v356 = vmul.f32 %v345, %v355
  %v357 = vrcp.pop %v350
  %v358 = vmul.f32 %v346, %v357
  %v359 = vmul.f32 %v352, %v200
  %v360 = vmul.f32 %v354, %v205
  %v361 = vmul.f32 %v356, %v210
  %v362 = vmul.f32 %v358, %v215
  %v363 = vadd.f32 %v180, %v359
  %v364 = vadd.f32 %v185, %v360
  %v365 = vadd.f32 %v190, %v361
  %v366 = vadd.f32 %v195, %v362
  %v367 = vmul.f32 %v200, %v363
  %v368 = vmul.f32 %v205, %v364
  %v369 = vmul.f32 %v210, %v365
  %v370 = vmul.f32 %v215, %v366
  %v371 = vrot.slane %v367, 4
  %v372 = vadd.f32 %v367, %v371
  %v373 = vrot.slane %v372, 2
  %v374 = vadd.f32 %v372, %v373
  %v375 = vrot.slane %v374, 1
  %v376 = vadd.f32 %v374, %v375
  %v377 = vrot.slane %v368, 4
  %v378 = vadd.f32 %v368, %v377
  %v379 = vrot.slane %v378, 2
  %v380 = vadd.f32 %v378, %v379
  %v381 = vrot.slane %v380, 1
  %v382 = vadd.f32 %v380, %v381
  %v383 = vrot.slane %v369, 4
  %v384 = vadd.f32 %v369, %v383
  %v385 = vrot.slane %v384, 2
  %v386 = vadd.f32 %v384, %v385
  %v387 = vrot.slane %v386, 1
  %v388 = vadd.f32 %v386, %v387
  %v389 = vrot.slane %v370, 4
  %v390 = vadd.f32 %v370, %v389
  %v391 = vrot.slane %v390, 2
  %v392 = vadd.f32 %v390, %v391
  %v393 = vrot.slane %v392, 1
  %v394 = vadd.f32 %v392, %v393
  %v395 = vmul.f32 %v200, %v17
  %v396 = vrot.slane %v395, 4
  %v397 = vadd.f32 %v395, %v396
  %v398 = vrot.slane %v397, 2
  %v399 = vadd.f32 %v397, %v398
  %v400 = vrot.slane %v399, 1
  %v401 = vadd.f32 %v399, %v400
  %v402 = vadd.f32 %v401, %v220
  %v403 = vtanh.pop %v402
  %v404 = vlaneseq
  %v405 = vshrl.u32 %v404, 7
  %v406 = vsub.s32 0, %v405
  %v407 = vrot.slane %v403, %v406
  %v408 = vmul.f32 %v363, %v407
  %v409 = vadd.f32 %v17, %v408
  %v410 = vmul.f32 %v403, %v403
  %v411 = vsub.f32 1.0, %v410
  %v412 = vmul.f32 %v411, %v376
  %v413 = vadd.f32 %v412, 1.0
  %v414 = vmul.f32 %v205, %v409
  %v415 = vrot.slane %v414, 4
  %v416 = vadd.f32 %v414, %v415
  %v417 = vrot.slane %v416, 2
  %v418 = vadd.f32 %v416, %v417
  %v419 = vrot.slane %v418, 1
  %v420 = vadd.f32 %v418, %v419
  %v421 = vadd.f32 %v420, %v220
  %v422 = vtanh.pop %v421
  %v423 = vlaneseq
  %v424 = vshrl.u32 %v423, 7
  %v425 = vsub.s32 1, %v424
  %v426 = vrot.slane %v422, %v425
  %v427 = vmul.f32 %v364, %v426
  %v428 = vadd.f32 %v409, %v427
  %v429 = vmul.f32 %v422, %v422
  %v430 = vsub.f32 1.0, %v429
  %v431 = vmul.f32 %v430, %v382
  %v432 = vadd.f32 %v431, 1.0
  %v434 = vrot.slane %v432, 1
  %v436 = vmul.f32 %v413, %v434
  %v437 = vmul.f32 %v210, %v428
  %v438 = vrot.slane %v437, 4
  %v439 = vadd.f32 %v437, %v438
  %v440 = vrot.slane %v439, 2
  %v441 = vadd.f32 %v439, %v440
  %v442 = vrot.slane %v441, 1
  %v443 = vadd.f32 %v441, %v442
  %v444 = vadd.f32 %v443, %v220
  %v445 = vtanh.pop %v444
  %v446 = vlaneseq
  %v447 = vshrl.u32 %v446, 7
  %v448 = vsub.s32 2, %v447
  %v449 = vrot.slane %v445, %v448
  %v450 = vmul.f32 %v365, %v449
  %v451 = vadd.f32 %v428, %v450
  %v452 = vmul.f32 %v445, %v445
  %v453 = vsub.f32 1.0, %v452
  %v454 = vmul.f32 %v453, %v388
  %v455 = vadd.f32 %v454, 1.0
  %v457 = vrot.slane %v455, 2
  %v459 = vmul.f32 %v436, %v457
  %v460 = vmul.f32 %v215, %v451
  %v461 = vrot.slane %v460, 4
  %v462 = vadd.f32 %v460, %v461
  %v463 = vrot.slane %v462, 2
  %v464 = vadd.f32 %v462, %v463
  %v465 = vrot.slane %v464, 1
  %v466 = vadd.f32 %v464, %v465
  %v467 = vadd.f32 %v466, %v220
  %v468 = vtanh.pop %v467
  %v469 = vlaneseq
  %v470 = vshrl.u32 %v469, 7
  %v471 = vsub.s32 3, %v470
  %v472 = vrot.slane %v468, %v471
  %v473 = vmul.f32 %v366, %v472
  %v474 = vadd.f32 %v451, %v473
  %v475 = vmul.f32 %v468, %v468
  %v476 = vsub.f32 1.0, %v475
  %v477 = vmul.f32 %v476, %v394
  %v478 = vadd.f32 %v477, 1.0
  %v480 = vrot.slane %v478, 3
  %v482 = vmul.f32 %v459, %v480
  %v483 = vand.u32 2147483647, %v482
  %v484 = vlog2.pop %v483
  %v485 = vmul.f32 %v484, 0.6931472
  %486 = vst [vmem:[%s4] sm:$0xff] %v474
  %487 = vst [vmem:[%s4 + $0x8] sm:$0x1] %v485
  // Predicated region
  $region18: #{planar_forward.1} parent=0 // pred_check
    _
  $region19: #{planar_forward.1} parent=0 // pred_check_branch
    %489 = sbr.rel (0) target = $region21
  $region20: #{planar_forward.1} parent=0 // pred_region
    _
  $region21: #{planar_forward.1} parent=0 // pred_fallthru
    _
  // Predicated region
  $region22: #{planar_forward.1} parent=0 // pred_check
    _
  $region23: #{planar_forward.1} parent=0 // pred_check_branch
    %491 = sbr.rel (0) target = $region25
  $region24: #{planar_forward.1} parent=0 // pred_region
    _
  $region25: #{planar_forward.1} parent=0 // pred_fallthru
    _

</llo_original>
